<compile_context>
chip_gen: v6e
topology: v6e:2x2x1
jax: 0.10.0
libtpu: 0.0.40
codegen_flags: <defaults>
</compile_context>

<pallas_src>
import functools

import jax
import jax.numpy as jnp
from jax import lax
from jax.experimental import pallas as pl
from jax.experimental.pallas import tpu as pltpu


def gen_indexes(graph_level, mode):
    """Icosphere node counts: nodes(l) = 10*4^l + 2. 'unpool' maps level -> level+1."""
    assert mode == 'unpool'
    n_in = 10 * (4 ** graph_level) + 2
    n_out = 10 * (4 ** (graph_level + 1)) + 2
    return n_in, n_out


def _unpool_ln_kernel(x_ref, wr_ref, br_ref, wt_ref, btl_ref, o_ref, *,
                      d_in, d_pad, denom, eps):
    # x_ref: (TB, d_in)  wr/br: (1, d_in)  wt/btl: (1, d_pad)  o_ref: (TB, d_out)
    f32 = jnp.float32
    x = x_ref[...].astype(f32)                                      # (TB, d_in)
    inv_denom = f32(1.0 / denom)

    # LayerNorm stats over the full padded [C, N_out] slab, computed from the real d_in
    # elements only (the pad is exactly zero):
    #   sum(padded)          == sum(x)
    #   sum((padded - mu)^2) == sum((x - mu)^2) + d_pad * mu^2          (exact, stable)
    mean = jnp.sum(x, axis=-1, keepdims=True) * inv_denom           # (TB, 1)
    xc = x - mean
    ssq = jnp.sum(xc * xc, axis=-1, keepdims=True) + f32(d_pad) * (mean * mean)
    inv_std = lax.rsqrt(ssq * inv_denom + f32(eps))                 # (TB, 1)

    # Final normalize/scale/bias in bf16 when the output is bf16 (bf16 VALU on v6e/v7x;
    # on v5e this silently promotes to f32 -- identical numerics, just no perf win).
    out_dtype = o_ref.dtype
    cdt = jnp.bfloat16 if out_dtype == jnp.bfloat16 else f32

    # Real region: reuse the already-centered xc -- one fused multiply-add per element.
    o_ref[:, :d_in] = ((xc.astype(cdt) * inv_std.astype(cdt)) * wr_ref[...].astype(cdt)
                       + br_ref[...].astype(cdt)).astype(out_dtype)

    # Padded tail, analytically: the normalized pad value is (0 - mean) * inv_std, so the
    # whole tail is a (TB,1) x (1,d_pad) broadcast -- no zero fill, no concatenate.
    if d_pad > 0:
        neg_scaled_mean = (-(mean * inv_std)).astype(cdt)           # (TB, 1)
        o_ref[:, d_in:] = (neg_scaled_mean * wt_ref[...].astype(cdt)
                           + btl_ref[...].astype(cdt)).astype(out_dtype)


def _tpu_vmem_capacity_bytes():
    """Per-core VMEM capacity; conservative 64 MiB fallback if the query is unavailable."""
    try:
        return int(pltpu.get_tpu_info().vmem_capacity_bytes)
    except Exception:
        return 64 * 1024 * 1024


def _choose_batch_tile(bt, d_in, d_out, in_itemsize, out_itemsize, sublane_pack,
                       budget_bytes):
    """Largest batch tile (rows / grid step) keeping pipeline buffers + temps in budget."""
    compute_itemsize = 2 if out_itemsize == 2 else 4
    per_row = (2 * d_in * in_itemsize           # double-buffered input pipeline
               + 2 * d_out * out_itemsize       # double-buffered output pipeline
               + 3 * d_in * 4                   # fp32 x, xc (+ slack)
               + 2 * d_out * compute_itemsize)  # output-expression temporaries
    tb = max(1, budget_bytes // per_row)
    if tb >= bt:
        return bt
    # TODO(synk): for very large graph levels where even `sublane_pack` rows blow the
    # budget, add a node-axis (lane) grid dimension with pl.when-gated running sum/sumsq
    # accumulation instead of clamping the row count here.
    return max(sublane_pack, (tb // sublane_pack) * sublane_pack)


def sphere_unpool(x, weight, bias, *, n_in, n_out, eps=1e-5, batch_tile=None):
    """x: (B, T, N_in, C) -> (B, T, N_out, C), matching SphereUnPool.forward."""
    B, T, N, C = x.shape
    assert N == n_in
    bt = B * T
    d_in = n_in * C
    d_out = n_out * C
    d_pad = d_out - d_in

    # Contiguous flatten: (B, T, N_in, C) -> (B*T, N_in*C).  Pure reshape, no copy.
    x2 = jnp.reshape(x, (bt, d_in))

    # LayerNorm params are stored (C, N_out); bring them to the flattened (node, channel)
    # order once and pre-split into real / padded-tail pieces (tiny; const-folded under jit).
    w_flat = jnp.reshape(jnp.transpose(weight, (1, 0)), (1, d_out))
    b_flat = jnp.reshape(jnp.transpose(bias, (1, 0)), (1, d_out))
    w_real, w_tail = w_flat[:, :d_in], w_flat[:, d_in:]
    b_real, b_tail = b_flat[:, :d_in], b_flat[:, d_in:]

    in_itemsize = jnp.dtype(x.dtype).itemsize
    out_itemsize = in_itemsize
    sublane_pack = {1: 32, 2: 16, 4: 8}.get(in_itemsize, 8)

    vmem_cap = _tpu_vmem_capacity_bytes()
    budget_bytes = min(40 << 20, vmem_cap // 3)
    vmem_limit = min(96 << 20, (vmem_cap * 3) // 4)
    min_steps = 2 if vmem_cap <= (64 << 20) else 1   # v7x: 2 TCs share the grid

    if batch_tile is not None:
        tb = batch_tile
    else:
        tb = _choose_batch_tile(bt, d_in, d_out, in_itemsize, out_itemsize,
                                sublane_pack, budget_bytes)
        if min_steps > 1 and pl.cdiv(bt, tb) < min_steps and bt >= min_steps * sublane_pack:
            # Give every TensorCore at least one grid step to chew on.
            half = pl.cdiv(bt, min_steps)
            tb = min(bt, pl.cdiv(half, sublane_pack) * sublane_pack)
    grid = (pl.cdiv(bt, tb),)

    kernel = functools.partial(_unpool_ln_kernel, d_in=d_in, d_pad=d_pad,
                               denom=float(d_out), eps=eps)

    cost = pl.CostEstimate(
        flops=bt * (4 * d_in + 3 * d_out),
        transcendentals=bt,
        bytes_accessed=bt * (d_in * in_itemsize + d_out * out_itemsize)
                       + 2 * d_out * jnp.dtype(weight.dtype).itemsize,
    )

    out2 = pl.pallas_call(
        kernel,
        out_shape=jax.ShapeDtypeStruct((bt, d_out), x.dtype),
        grid_spec=pltpu.PrefetchScalarGridSpec(
            num_scalar_prefetch=0,
            grid=grid,
            in_specs=[
                pl.BlockSpec((tb, d_in), lambda i: (i, 0)),
                # Constant index_maps => params fetched once, never re-DMA'd per step.
                pl.BlockSpec((1, d_in), lambda i: (0, 0)),
                pl.BlockSpec((1, d_in), lambda i: (0, 0)),
                pl.BlockSpec((1, d_pad), lambda i: (0, 0)),
                pl.BlockSpec((1, d_pad), lambda i: (0, 0)),
            ],
            out_specs=pl.BlockSpec((tb, d_out), lambda i: (i, 0)),
        ),
        compiler_params=pltpu.CompilerParams(
            dimension_semantics=("parallel",),    # megacore-shardable batch axis
            vmem_limit_bytes=vmem_limit,
        ),
        cost_estimate=cost,
    )(x2, w_real, b_real, w_tail, b_tail)

    # Contiguous un-flatten: (B*T, N_out*C) -> (B, T, N_out, C).  No transpose, no copy.
    return jnp.reshape(out2, (B, T, n_out, C))


def _reference(x, weight, bias, *, n_in, n_out, eps=1e-5):
    B, T, N, C = x.shape
    t = jnp.transpose(jnp.reshape(x, (B * T, N, C)), (0, 2, 1))        # (BT, C, N_in)
    padded = jnp.pad(t, ((0, 0), (0, 0), (0, n_out - n_in)))           # (BT, C, N_out)
    mean = jnp.mean(padded, axis=(1, 2), keepdims=True)
    var = jnp.mean((padded - mean) ** 2, axis=(1, 2), keepdims=True)
    norm = (padded - mean) / jnp.sqrt(var + eps)
    out = norm * weight[None] + bias[None]
    return jnp.transpose(jnp.reshape(out, (B, T, C, n_out)), (0, 1, 3, 2))


if __name__ == "__main__":
    key = jax.random.PRNGKey(0)

    # Case 1: graph_level 0, small shapes (module defaults): 12 -> 42 nodes, C=4.
    graph_level, C, B, T = 0, 4, 2, 3
    n_in, n_out = gen_indexes(graph_level, 'unpool')
    k1, k2, k3, key = jax.random.split(key, 4)
    x = jax.random.normal(k1, (B, T, n_in, C), dtype=jnp.float32)
    weight = 1.0 + 0.1 * jax.random.normal(k2, (C, n_out), dtype=jnp.float32)
    bias = 0.1 * jax.random.normal(k3, (C, n_out), dtype=jnp.float32)

    out = jax.block_until_ready(sphere_unpool(x, weight, bias, n_in=n_in, n_out=n_out))
    ref = _reference(x, weight, bias, n_in=n_in, n_out=n_out)
    assert out.shape == (B, T, n_out, C)
    assert jnp.allclose(out, ref, atol=1e-5, rtol=1e-5)

    # Case 2: graph_level 1, multi-step batched grid (explicit 8 samples / block).
    graph_level, C, B, T = 1, 8, 2, 8
    n_in, n_out = gen_indexes(graph_level, 'unpool')                   # 42 -> 162
    k1, k2, k3, key = jax.random.split(key, 4)
    x = jax.random.normal(k1, (B, T, n_in, C), dtype=jnp.float32)
    weight = 1.0 + 0.1 * jax.random.normal(k2, (C, n_out), dtype=jnp.float32)
    bias = 0.1 * jax.random.normal(k3, (C, n_out), dtype=jnp.float32)

    out = jax.block_until_ready(
        sphere_unpool(x, weight, bias, n_in=n_in, n_out=n_out, batch_tile=8))
    ref = _reference(x, weight, bias, n_in=n_in, n_out=n_out)
    assert out.shape == (B, T, n_out, C)
    assert jnp.allclose(out, ref, atol=1e-5, rtol=1e-5)

    # Case 3: bf16 input exercises the bf16 output/MAC path (stats remain fp32).
    kb1, kb2, kb3, key = jax.random.split(key, 4)
    xb = jax.random.normal(kb1, (B, T, n_in, C), dtype=jnp.float32).astype(jnp.bfloat16)
    wb = (1.0 + 0.1 * jax.random.normal(kb2, (C, n_out), dtype=jnp.float32))
    bb = 0.1 * jax.random.normal(kb3, (C, n_out), dtype=jnp.float32)
    out_b = jax.block_until_ready(
        sphere_unpool(xb, wb.astype(jnp.bfloat16), bb.astype(jnp.bfloat16),
                      n_in=n_in, n_out=n_out))
    ref_b = _reference(xb.astype(jnp.float32), wb, bb, n_in=n_in, n_out=n_out)
    assert out_b.shape == (B, T, n_out, C)
    assert jnp.allclose(out_b.astype(jnp.float32), ref_b, atol=0.25, rtol=0.05)

    print("KERNEL_OK")
</pallas_src>

<mosaic_0001>
module attributes {stable_mosaic.version = 11 : i64} {
  func.func @_unpool_ln_kernel(%arg0: i32, %arg1: memref<6x48xf32, #tpu.memory_space<vmem>>, %arg2: memref<1x48xf32, #tpu.memory_space<vmem>>, %arg3: memref<1x48xf32, #tpu.memory_space<vmem>>, %arg4: memref<1x120xf32, #tpu.memory_space<vmem>>, %arg5: memref<1x120xf32, #tpu.memory_space<vmem>>, %arg6: memref<6x168xf32, #tpu.memory_space<vmem>>) attributes {dimension_semantics = [#tpu.dimension_semantics<parallel>], iteration_bounds = array<i64: 1>, scalar_prefetch = 0 : i64, scratch_operands = 0 : i64, tpu.core_type = #tpu.core_type<tc>, window_params = [{transform_indices = @transform_0, window_bounds = array<i64: 6, 48>}, {pipeline_mode = #tpu.pipeline_mode<synchronous>, transform_indices = @transform_1, window_bounds = array<i64: 1, 48>}, {pipeline_mode = #tpu.pipeline_mode<synchronous>, transform_indices = @transform_2, window_bounds = array<i64: 1, 48>}, {pipeline_mode = #tpu.pipeline_mode<synchronous>, transform_indices = @transform_3, window_bounds = array<i64: 1, 120>}, {pipeline_mode = #tpu.pipeline_mode<synchronous>, transform_indices = @transform_4, window_bounds = array<i64: 1, 120>}, {transform_indices = @transform_5, window_bounds = array<i64: 6, 168>}]} {
    %c0 = arith.constant 0 : index
    %c0_0 = arith.constant 0 : index
    %0 = vector.load %arg1[%c0, %c0_0] : memref<6x48xf32, #tpu.memory_space<vmem>>, vector<6x48xf32>
    %cst = arith.constant dense<0.000000e+00> : vector<6xf32>
    %1 = vector.multi_reduction <add>, %0, %cst [1] : vector<6x48xf32> to vector<6xf32>
    %2 = vector.shape_cast %1 : vector<6xf32> to vector<6x1xf32>
    %cst_1 = arith.constant 0.00595238106 : f32
    %3 = vector.broadcast %cst_1 : f32 to vector<6x1xf32>
    %4 = arith.mulf %2, %3 : vector<6x1xf32>
    %5 = vector.broadcast %4 : vector<6x1xf32> to vector<6x48xf32>
    %6 = arith.subf %0, %5 : vector<6x48xf32>
    %7 = arith.mulf %6, %6 : vector<6x48xf32>
    %cst_2 = arith.constant dense<0.000000e+00> : vector<6xf32>
    %8 = vector.multi_reduction <add>, %7, %cst_2 [1] : vector<6x48xf32> to vector<6xf32>
    %9 = vector.shape_cast %8 : vector<6xf32> to vector<6x1xf32>
    %10 = arith.mulf %4, %4 : vector<6x1xf32>
    %cst_3 = arith.constant 1.200000e+02 : f32
    %11 = vector.broadcast %cst_3 : f32 to vector<6x1xf32>
    %12 = arith.mulf %11, %10 : vector<6x1xf32>
    %13 = arith.addf %9, %12 : vector<6x1xf32>
    %cst_4 = arith.constant 0.00595238106 : f32
    %14 = vector.broadcast %cst_4 : f32 to vector<6x1xf32>
    %15 = arith.mulf %13, %14 : vector<6x1xf32>
    %cst_5 = arith.constant 9.99999974E-6 : f32
    %16 = vector.broadcast %cst_5 : f32 to vector<6x1xf32>
    %17 = arith.addf %15, %16 : vector<6x1xf32>
    %18 = math.rsqrt %17 : vector<6x1xf32>
    %19 = vector.broadcast %18 : vector<6x1xf32> to vector<6x48xf32>
    %20 = arith.mulf %6, %19 : vector<6x48xf32>
    %c0_6 = arith.constant 0 : index
    %c0_7 = arith.constant 0 : index
    %21 = vector.load %arg2[%c0_6, %c0_7] : memref<1x48xf32, #tpu.memory_space<vmem>>, vector<1x48xf32>
    %22 = vector.broadcast %21 : vector<1x48xf32> to vector<6x48xf32>
    %23 = arith.mulf %20, %22 : vector<6x48xf32>
    %c0_8 = arith.constant 0 : index
    %c0_9 = arith.constant 0 : index
    %24 = vector.load %arg3[%c0_8, %c0_9] : memref<1x48xf32, #tpu.memory_space<vmem>>, vector<1x48xf32>
    %25 = vector.broadcast %24 : vector<1x48xf32> to vector<6x48xf32>
    %26 = arith.addf %23, %25 : vector<6x48xf32>
    %c0_10 = arith.constant 0 : index
    %c0_11 = arith.constant 0 : index
    %27 = vector.load %arg6[%c0_10, %c0_11] : memref<6x168xf32, #tpu.memory_space<vmem>>, vector<6x48xf32>
    tpu.vector_store %arg6[%c0_10, %c0_11], %26 {strides = array<i32>} : memref<6x168xf32, #tpu.memory_space<vmem>>, vector<6x48xf32>,
    %28 = arith.mulf %4, %18 : vector<6x1xf32>
    %cst_12 = arith.constant 0.000000e+00 : f32
    %29 = vector.broadcast %cst_12 : f32 to vector<6x1xf32>
    %30 = arith.subf %29, %28 : vector<6x1xf32>
    %c0_13 = arith.constant 0 : index
    %c0_14 = arith.constant 0 : index
    %31 = vector.load %arg4[%c0_13, %c0_14] : memref<1x120xf32, #tpu.memory_space<vmem>>, vector<1x120xf32>
    %32 = vector.broadcast %30 : vector<6x1xf32> to vector<6x120xf32>
    %33 = vector.broadcast %31 : vector<1x120xf32> to vector<6x120xf32>
    %34 = arith.mulf %32, %33 : vector<6x120xf32>
    %c0_15 = arith.constant 0 : index
    %c0_16 = arith.constant 0 : index
    %35 = vector.load %arg5[%c0_15, %c0_16] : memref<1x120xf32, #tpu.memory_space<vmem>>, vector<1x120xf32>
    %36 = vector.broadcast %35 : vector<1x120xf32> to vector<6x120xf32>
    %37 = arith.addf %34, %36 : vector<6x120xf32>
    %c0_17 = arith.constant 0 : index
    %c48 = arith.constant 48 : index
    %38 = vector.load %arg6[%c0_17, %c48] : memref<6x168xf32, #tpu.memory_space<vmem>>, vector<6x120xf32>
    tpu.vector_store %arg6[%c0_17, %c48], %37 {strides = array<i32>} : memref<6x168xf32, #tpu.memory_space<vmem>>, vector<6x120xf32>,
    return
  }
  func.func @transform_0(%arg0: i32) -> (i32, i32) {
    %c0_i32 = arith.constant 0 : i32
    %c0_i32_0 = arith.constant 0 : i32
    return %arg0, %c0_i32 : i32, i32
  }
  func.func @transform_1(%arg0: i32) -> (i32, i32) {
    %c0_i32 = arith.constant 0 : i32
    %c0_i32_0 = arith.constant 0 : i32
    %c0_i32_1 = arith.constant 0 : i32
    return %c0_i32, %c0_i32_0 : i32, i32
  }
  func.func @transform_2(%arg0: i32) -> (i32, i32) {
    %c0_i32 = arith.constant 0 : i32
    %c0_i32_0 = arith.constant 0 : i32
    %c0_i32_1 = arith.constant 0 : i32
    return %c0_i32, %c0_i32_0 : i32, i32
  }
  func.func @transform_3(%arg0: i32) -> (i32, i32) {
    %c0_i32 = arith.constant 0 : i32
    %c0_i32_0 = arith.constant 0 : i32
    %c0_i32_1 = arith.constant 0 : i32
    return %c0_i32, %c0_i32_0 : i32, i32
  }
  func.func @transform_4(%arg0: i32) -> (i32, i32) {
    %c0_i32 = arith.constant 0 : i32
    %c0_i32_0 = arith.constant 0 : i32
    %c0_i32_1 = arith.constant 0 : i32
    return %c0_i32, %c0_i32_0 : i32, i32
  }
  func.func @transform_5(%arg0: i32) -> (i32, i32) {
    %c0_i32 = arith.constant 0 : i32
    %c0_i32_0 = arith.constant 0 : i32
    return %arg0, %c0_i32 : i32, i32
  }
}

</mosaic_0001>

<llo_original>
// kernel: tpu_custom_call.1
$region0: #{tpu_custom_call.1}
  #allocation0 [shape = 'u32[]', space=smem, size = 0x4, offset = 0x4, fixed_abs, tag = 'smem constant byte address 0x4 - core index']
  #allocation1 [shape = 'u32[144,128]{1,0:T(1,128)}', space=vmem, size = 0x12000, scoped, tag = 'internal scratch']
  %s0 = inlined_call_operand.hbm [shape: f32[6,48], index: 0, kind: input, shape index: {}]
  %s1 = inlined_call_operand.vmem [shape: f32[1,48], index: 1, kind: input, shape index: {}]
  %s2 = inlined_call_operand.vmem [shape: f32[1,48], index: 2, kind: input, shape index: {}]
  %s3 = inlined_call_operand.vmem [shape: f32[1,120], index: 3, kind: input, shape index: {}]
  %s4 = inlined_call_operand.vmem [shape: f32[1,120], index: 4, kind: input, shape index: {}]
  %s5 = inlined_call_operand.hbm [shape: f32[6,168], index: 5, kind: output, shape index: {}]
  %s6 = sld [smem:[#allocation0]]
  $region34: #{tpu_custom_call.1} parent=0
    _
  %s8 = ssub.s32 1, %s6
  %s9 = scalar_select 0, %s8, %s6
  $region1: #{tpu_custom_call.1} parent=0
    #allocation2 [shape = 'u8[4096]{0}', space=vmem, size = 0x1000, scoped, tag = 'input window, operand 0, single buffered']
    #allocation3 [shape = 's32[1]{0}', space=sflag, size = 0x4, scoped, tag = 'scoped memory for tpu_custom_call.1']
    #allocation4 [shape = 's32[1]{0}', space=sflag, size = 0x4, scoped, tag = 'scoped memory for tpu_custom_call.1']
    #allocation5 [shape = 'u8[8192]{0}', space=vmem, size = 0x2000, scoped, tag = 'output window, operand 0, single buffered']
    %10 = vsyncpa [#allocation3], 0
    %11 = vsyncpa [#allocation4], 0
    // Predicated region
    $region2: #{tpu_custom_call.1} parent=1 // pred_check
      _
    $region3: #{tpu_custom_call.1} parent=1 // pred_check_branch
      %13 = sbr.rel (0) target = $region5
    $region4: #{tpu_custom_call.1} parent=1 // pred_region
      %s15 = ssub.s32 128, 128
      %16 = vsyncadd [#allocation3], %s15
      %s18 = sshll.u32 [#allocation2], 4
      %s19 = int_to_ptr.vmem [resolvable:$true] %s18
      %21 = dma.hbm_to_vmem [thread:$0]  %s0, 128, %s19, [#allocation3]
    $region5: #{tpu_custom_call.1} parent=1 // pred_fallthru
      _
    // Predicated region
    $region6: #{tpu_custom_call.1} parent=1 // pred_check
      _
    $region7: #{tpu_custom_call.1} parent=1 // pred_check_branch
      %23 = sbr.rel (0) target = $region9
    $region8: #{tpu_custom_call.1} parent=1 // pred_region
      _
    $region9: #{tpu_custom_call.1} parent=1 // pred_fallthru
      _
    // Predicated region
    $region10: #{tpu_custom_call.1} parent=1 // pred_check
      _
    $region11: #{tpu_custom_call.1} parent=1 // pred_check_branch
      %25 = sbr.rel (0) target = $region13
    $region12: #{tpu_custom_call.1} parent=1 // pred_region
      _
    $region13: #{tpu_custom_call.1} parent=1 // pred_fallthru
      _
    // Predicated region
    $region14: #{tpu_custom_call.1} parent=1 // pred_check
      _
    $region15: #{tpu_custom_call.1} parent=1 // pred_check_branch
      %27 = sbr.rel (0) target = $region17
    $region16: #{tpu_custom_call.1} parent=1 // pred_region
      _
    $region17: #{tpu_custom_call.1} parent=1 // pred_fallthru
      _
    // Predicated region
    $region18: #{tpu_custom_call.1} parent=1 // pred_check
      _
    $region19: #{tpu_custom_call.1} parent=1 // pred_check_branch
      %29 = sbr.rel (0) target = $region21
    $region20: #{tpu_custom_call.1} parent=1 // pred_region
      _
    $region21: #{tpu_custom_call.1} parent=1 // pred_fallthru
      _
    // Predicated region
    $region22: #{tpu_custom_call.1} parent=1 // pred_check
      _
    $region23: #{tpu_custom_call.1} parent=1 // pred_check_branch
      %31 = sbr.rel (0) target = $region25
    $region24: #{tpu_custom_call.1} parent=1 // pred_region
      %32 = dma.done [#allocation3], 128
    $region25: #{tpu_custom_call.1} parent=1 // pred_fallthru
      _
    %v33 = vld [vmem:[#allocation2] sm:$0x3f]
    %vm34 = vcmask 390144
    %v35 = vsel %vm34, %v33, 0.0
    %36 = vadd.xlane.f32.xlu0 %v35
    %v37 = vpop.xlane.xlu0 %36
    %v38 = vmul.f32 %v37, 0.005952381
    %v39 = vsub.f32 %v33, %v38
    %v40 = vmul.f32 %v39, %v39
    %v41 = vsel %vm34, %v40, 0.0
    %42 = vadd.xlane.f32.xlu0 %v41
    %v43 = vpop.xlane.xlu0 %42
    %v44 = vmul.f32 %v38, %v38
    %v45 = vmul.f32 %v44, 120.0
    %v46 = vadd.f32 %v43, %v45
    %v47 = vmul.f32 %v46, 0.005952381
    %v48 = vadd.f32 %v47, 1e-05
    %v49 = vrsqrt.pop %v48
    %v50 = vmul.f32 %v39, %v49
    %v51 = vld [vmem:[%s1] sm:$0x1]
    %v53 = vlaneseq
    %v54 = vshrl.u32 %v53, 7
    %v55 = vsub.s32 0, %v54
    %v56 = vrot.slane %v51, %v55
    %v58 = vmul.f32 %v50, %v56
    %v59 = vld [vmem:[%s2] sm:$0x1]
    %v61 = vlaneseq
    %v62 = vshrl.u32 %v61, 7
    %v63 = vsub.s32 0, %v62
    %v64 = vrot.slane %v59, %v63
    %v66 = vadd.f32 %v58, %v64
    %67 = vst.msk [vmem:[#allocation5] sm:$0x3f] %vm34, %v66
    %v68 = vmul.f32 %v38, %v49
    %v69 = vsub.f32 0.0, %v68
    %v70 = vld [vmem:[%s3] sm:$0x1]
    %v72 = vlaneseq
    %v73 = vshrl.u32 %v72, 7
    %v74 = vsub.s32 0, %v73
    %v75 = vrot.slane %v70, %v74
    %v77 = vmul.f32 %v69, %v75
    %v78 = vld [vmem:[%s4] sm:$0x1]
    %v80 = vlaneseq
    %v81 = vshrl.u32 %v80, 7
    %v82 = vsub.s32 0, %v81
    %v83 = vrot.slane %v78, %v82
    %v85 = vadd.f32 %v77, %v83
    %87 = vrot.lane.b32.xlu0 %v85, 48
    %v88 = vpop.permute.xlu0 %87
    %vm90 = vcmask 1045888
    %91 = vst.msk [vmem:[#allocation5] sm:$0x3f] %vm90, %v88
    %vm92 = vcmask 324608
    %93 = vst.msk [vmem:[#allocation5 + $0x8] sm:$0x3f] %vm92, %v88
    // Predicated region
    $region26: #{tpu_custom_call.1} parent=1 // pred_check
      _
    $region27: #{tpu_custom_call.1} parent=1 // pred_check_branch
      %95 = sbr.rel (0) target = $region29
    $region28: #{tpu_custom_call.1} parent=1 // pred_region
      %s97 = ssub.s32 256, 256
      %98 = vsyncadd [#allocation4], %s97
      %s100 = sshll.u32 [#allocation5], 4
      %s101 = int_to_ptr.vmem [resolvable:$true] %s100
      %103 = dma.vmem_to_hbm [thread:$0]  %s101, 256, %s5, [#allocation4]
    $region29: #{tpu_custom_call.1} parent=1 // pred_fallthru
      _
    // Predicated region
    $region30: #{tpu_custom_call.1} parent=1 // pred_check
      _
    $region31: #{tpu_custom_call.1} parent=1 // pred_check_branch
      %105 = sbr.rel (0) target = $region33
    $region32: #{tpu_custom_call.1} parent=1 // pred_region
      %106 = dma.done [#allocation4], 256
    $region33: #{tpu_custom_call.1} parent=1 // pred_fallthru
      _
    %107 = vsyncpa [#allocation3], 1
    %108 = vsyncpa [#allocation4], 1

</llo_original>
